<compile_context>
chip_gen: v7x
topology: tpu7x:2x2x1
jax: 0.10.0
libtpu: 0.0.40
codegen_flags: <defaults>
</compile_context>

<pallas_src>
import numpy as np

import jax
import jax.numpy as jnp
from jax.experimental import pallas as pl
from jax.experimental.pallas import tpu as pltpu


def _make_sliding_mode_kernel(T, delta):
    """Builds a kernel specialized for static T (num time steps) and delta."""
    delta = np.float32(delta)

    def kernel(init_ref, params_ref, all_sv_ref, loss_ref):
        """Euler integration + sum-MSE loss, fully unrolled.

        init_ref   : VMEM (1, 2)  f32   initial state [x1, x2]
        params_ref : SMEM (2,)    f32   [p0, p1]
        all_sv_ref : VMEM (T, 2)  f32   state trajectory (output)
        loss_ref   : VMEM (1, 1)  f32   total sum-MSE loss (output)
        """
        p0 = params_ref[0]
        p1 = params_ref[1]

        # Record initial state (row 0 of the trajectory).
        all_sv_ref[0:1, :] = init_ref[...]

        x1 = init_ref[:, 0:1]            # (1, 1)
        x2 = init_ref[:, 1:2]            # (1, 1)
        loss = jnp.zeros((1, 1), jnp.float32)

        one = np.float32(1.0)
        ten = np.float32(10.0)

        # Fully unrolled recurrence: i, t are trace-time constants, stores are
        # static-index single-row stores.
        for i in range(T - 1):
            t = np.float32(i + 1) * delta            # f32 literal at compile time

            # control law: sliding surface s, smoothed sign via tanh (EUP)
            s = p0 * (x1 - t) + (x2 - one)
            u = -p1 * jnp.tanh(ten * s)

            # system dynamics + explicit Euler update
            nx1 = x1 + delta * x2
            nx2 = x2 + delta * u

            # MSELoss(reduction='sum') against desired at step i+1
            e1 = nx1 - t
            e2 = nx2 - one
            loss = loss + e1 * e1 + e2 * e2

            # single merged row store at static row index i+1
            all_sv_ref[i + 1:i + 2, :] = jnp.concatenate([nx1, nx2], axis=1)

            x1, x2 = nx1, nx2

        loss_ref[...] = loss

    return kernel


def sliding_mode_forward(time, delta, initial_values, param_values):
    """Mirrors SlidingMode.forward(time, delta, param_values)."""
    # time_steps = arange(0, time + delta, delta)  ->  T = time/delta + 1 entries
    T = int(round(time / delta)) + 1
    D = int(initial_values.shape[0])

    init = initial_values.reshape(1, D).astype(jnp.float32)
    params = param_values.astype(jnp.float32)

    all_sv, loss = pl.pallas_call(
        _make_sliding_mode_kernel(T, delta),
        out_shape=(
            jax.ShapeDtypeStruct((T, D), jnp.float32),
            jax.ShapeDtypeStruct((1, 1), jnp.float32),
        ),
        in_specs=[
            pl.BlockSpec(memory_space=pltpu.MemorySpace.VMEM),   # initial state
            pl.BlockSpec(memory_space=pltpu.MemorySpace.SMEM),   # params
        ],
        out_specs=(
            pl.BlockSpec(memory_space=pltpu.MemorySpace.VMEM),   # trajectory
            pl.BlockSpec(memory_space=pltpu.MemorySpace.VMEM),   # loss
        ),
    )(init, params)

    # Desired trajectory has no dependence on the recurrence -> computed outside
    # the kernel (trivially fused by XLA): x1_d = t, x2_d = 1.
    ts = jnp.arange(T, dtype=jnp.float32) * jnp.float32(delta)
    desired = jnp.stack([ts, jnp.ones((T,), jnp.float32)], axis=1)

    return all_sv, desired, loss[0, 0]


def _reference(time, delta, init, params):
    """Pure numpy reference of the same forward pass (float32 throughout)."""
    T = int(round(time / delta)) + 1
    delta = np.float32(delta)
    ts = np.arange(T, dtype=np.float32) * delta
    desired = np.stack([ts, np.ones(T, np.float32)], axis=1)
    p0, p1 = np.float32(params[0]), np.float32(params[1])
    x1, x2 = np.float32(init[0]), np.float32(init[1])
    all_sv = [[x1, x2]]
    loss = np.float32(0.0)
    for i in range(1, T):
        t = np.float32(i) * delta
        s = p0 * (x1 - t) + (x2 - np.float32(1.0))
        u = -p1 * np.tanh(np.float32(10.0) * s)
        nx1 = x1 + delta * x2
        nx2 = x2 + delta * u
        e1 = nx1 - t
        e2 = nx2 - np.float32(1.0)
        loss = loss + e1 * e1 + e2 * e2
        x1, x2 = nx1, nx2
        all_sv.append([x1, x2])
    return np.asarray(all_sv, np.float32), desired, np.float32(loss)


if __name__ == "__main__":
    key = jax.random.PRNGKey(0)

    # forward(time, delta, param_values):
    time_horizon = 1.0
    delta = 0.0625                                         # -> T = 17 time steps
    initial_values = jnp.array([0.5, 0.0], jnp.float32)    # config['initial']
    # module default is init='ones'; here we exercise the `param_values`
    # override path with deterministic random params.
    param_values = jax.random.normal(key, (2,), dtype=jnp.float32)

    all_sv, desired, loss = sliding_mode_forward(
        time_horizon, delta, initial_values, param_values)
    jax.block_until_ready((all_sv, desired, loss))

    # correctness check vs pure-numpy reference
    ref_sv, ref_des, ref_loss = _reference(
        time_horizon, delta, np.asarray(initial_values), np.asarray(param_values))
    assert all_sv.shape == desired.shape == ref_sv.shape
    np.testing.assert_allclose(np.asarray(all_sv), ref_sv, rtol=1e-5, atol=1e-5)
    np.testing.assert_allclose(np.asarray(desired), ref_des, rtol=1e-5, atol=1e-5)
    np.testing.assert_allclose(float(loss), float(ref_loss), rtol=1e-4, atol=1e-5)

    print("KERNEL_OK")
</pallas_src>

<mosaic_0001>
module attributes {stable_mosaic.version = 11 : i64} {
  func.func @kernel(%arg0: memref<1x2xf32, #tpu.memory_space<vmem>>, %arg1: memref<2xf32, #tpu.memory_space<smem>>, %arg2: memref<17x2xf32, #tpu.memory_space<vmem>>, %arg3: memref<1x1xf32, #tpu.memory_space<vmem>>) attributes {dimension_semantics = [], scalar_prefetch = 0 : i64, scratch_operands = 0 : i64, tpu.core_type = #tpu.core_type<tc>} {
    %c0 = arith.constant 0 : index
    %0 = memref.load %arg1[%c0] : memref<2xf32, #tpu.memory_space<smem>>
    %c1 = arith.constant 1 : index
    %1 = memref.load %arg1[%c1] : memref<2xf32, #tpu.memory_space<smem>>
    %c0_0 = arith.constant 0 : index
    %c0_1 = arith.constant 0 : index
    %2 = vector.load %arg0[%c0_0, %c0_1] : memref<1x2xf32, #tpu.memory_space<vmem>>, vector<1x2xf32>
    %c0_2 = arith.constant 0 : index
    %c0_3 = arith.constant 0 : index
    %3 = vector.load %arg2[%c0_2, %c0_3] : memref<17x2xf32, #tpu.memory_space<vmem>>, vector<1x2xf32>
    tpu.vector_store %arg2[%c0_2, %c0_3], %2 {strides = array<i32>} : memref<17x2xf32, #tpu.memory_space<vmem>>, vector<1x2xf32>,
    %c0_4 = arith.constant 0 : index
    %c0_5 = arith.constant 0 : index
    %4 = vector.load %arg0[%c0_4, %c0_5] : memref<1x2xf32, #tpu.memory_space<vmem>>, vector<1x1xf32>
    %c0_6 = arith.constant 0 : index
    %c1_7 = arith.constant 1 : index
    %5 = vector.load %arg0[%c0_6, %c1_7] : memref<1x2xf32, #tpu.memory_space<vmem>>, vector<1x1xf32>
    %cst = arith.constant 0.000000e+00 : f32
    %6 = vector.broadcast %cst : f32 to vector<1x1xf32>
    %cst_8 = arith.constant 6.250000e-02 : f32
    %7 = vector.broadcast %cst_8 : f32 to vector<1x1xf32>
    %8 = arith.subf %4, %7 : vector<1x1xf32>
    %9 = vector.broadcast %0 : f32 to vector<1x1xf32>
    %10 = arith.mulf %9, %8 : vector<1x1xf32>
    %cst_9 = arith.constant 1.000000e+00 : f32
    %11 = vector.broadcast %cst_9 : f32 to vector<1x1xf32>
    %12 = arith.subf %5, %11 : vector<1x1xf32>
    %13 = arith.addf %10, %12 : vector<1x1xf32>
    %cst_10 = arith.constant 0.000000e+00 : f32
    %14 = arith.subf %cst_10, %1 : f32
    %cst_11 = arith.constant 1.000000e+01 : f32
    %15 = vector.broadcast %cst_11 : f32 to vector<1x1xf32>
    %16 = arith.mulf %15, %13 : vector<1x1xf32>
    %17 = math.tanh %16 : vector<1x1xf32>
    %18 = vector.broadcast %14 : f32 to vector<1x1xf32>
    %19 = arith.mulf %18, %17 : vector<1x1xf32>
    %cst_12 = arith.constant 6.250000e-02 : f32
    %20 = vector.broadcast %cst_12 : f32 to vector<1x1xf32>
    %21 = arith.mulf %20, %5 : vector<1x1xf32>
    %22 = arith.addf %4, %21 : vector<1x1xf32>
    %cst_13 = arith.constant 6.250000e-02 : f32
    %23 = vector.broadcast %cst_13 : f32 to vector<1x1xf32>
    %24 = arith.mulf %23, %19 : vector<1x1xf32>
    %25 = arith.addf %5, %24 : vector<1x1xf32>
    %cst_14 = arith.constant 6.250000e-02 : f32
    %26 = vector.broadcast %cst_14 : f32 to vector<1x1xf32>
    %27 = arith.subf %22, %26 : vector<1x1xf32>
    %cst_15 = arith.constant 1.000000e+00 : f32
    %28 = vector.broadcast %cst_15 : f32 to vector<1x1xf32>
    %29 = arith.subf %25, %28 : vector<1x1xf32>
    %30 = arith.mulf %27, %27 : vector<1x1xf32>
    %31 = arith.addf %6, %30 : vector<1x1xf32>
    %32 = arith.mulf %29, %29 : vector<1x1xf32>
    %33 = arith.addf %31, %32 : vector<1x1xf32>
    %34 = tpu.concatenate %22, %25 in 1 : vector<1x1xf32>, vector<1x1xf32> -> vector<1x2xf32>
    %c1_16 = arith.constant 1 : index
    %c0_17 = arith.constant 0 : index
    %35 = vector.load %arg2[%c1_16, %c0_17] : memref<17x2xf32, #tpu.memory_space<vmem>>, vector<1x2xf32>
    tpu.vector_store %arg2[%c1_16, %c0_17], %34 {strides = array<i32>} : memref<17x2xf32, #tpu.memory_space<vmem>>, vector<1x2xf32>,
    %cst_18 = arith.constant 1.250000e-01 : f32
    %36 = vector.broadcast %cst_18 : f32 to vector<1x1xf32>
    %37 = arith.subf %22, %36 : vector<1x1xf32>
    %38 = vector.broadcast %0 : f32 to vector<1x1xf32>
    %39 = arith.mulf %38, %37 : vector<1x1xf32>
    %cst_19 = arith.constant 1.000000e+00 : f32
    %40 = vector.broadcast %cst_19 : f32 to vector<1x1xf32>
    %41 = arith.subf %25, %40 : vector<1x1xf32>
    %42 = arith.addf %39, %41 : vector<1x1xf32>
    %cst_20 = arith.constant 0.000000e+00 : f32
    %43 = arith.subf %cst_20, %1 : f32
    %cst_21 = arith.constant 1.000000e+01 : f32
    %44 = vector.broadcast %cst_21 : f32 to vector<1x1xf32>
    %45 = arith.mulf %44, %42 : vector<1x1xf32>
    %46 = math.tanh %45 : vector<1x1xf32>
    %47 = vector.broadcast %43 : f32 to vector<1x1xf32>
    %48 = arith.mulf %47, %46 : vector<1x1xf32>
    %cst_22 = arith.constant 6.250000e-02 : f32
    %49 = vector.broadcast %cst_22 : f32 to vector<1x1xf32>
    %50 = arith.mulf %49, %25 : vector<1x1xf32>
    %51 = arith.addf %22, %50 : vector<1x1xf32>
    %cst_23 = arith.constant 6.250000e-02 : f32
    %52 = vector.broadcast %cst_23 : f32 to vector<1x1xf32>
    %53 = arith.mulf %52, %48 : vector<1x1xf32>
    %54 = arith.addf %25, %53 : vector<1x1xf32>
    %cst_24 = arith.constant 1.250000e-01 : f32
    %55 = vector.broadcast %cst_24 : f32 to vector<1x1xf32>
    %56 = arith.subf %51, %55 : vector<1x1xf32>
    %cst_25 = arith.constant 1.000000e+00 : f32
    %57 = vector.broadcast %cst_25 : f32 to vector<1x1xf32>
    %58 = arith.subf %54, %57 : vector<1x1xf32>
    %59 = arith.mulf %56, %56 : vector<1x1xf32>
    %60 = arith.addf %33, %59 : vector<1x1xf32>
    %61 = arith.mulf %58, %58 : vector<1x1xf32>
    %62 = arith.addf %60, %61 : vector<1x1xf32>
    %63 = tpu.concatenate %51, %54 in 1 : vector<1x1xf32>, vector<1x1xf32> -> vector<1x2xf32>
    %c2 = arith.constant 2 : index
    %c0_26 = arith.constant 0 : index
    %64 = vector.load %arg2[%c2, %c0_26] : memref<17x2xf32, #tpu.memory_space<vmem>>, vector<1x2xf32>
    tpu.vector_store %arg2[%c2, %c0_26], %63 {strides = array<i32>} : memref<17x2xf32, #tpu.memory_space<vmem>>, vector<1x2xf32>,
    %cst_27 = arith.constant 1.875000e-01 : f32
    %65 = vector.broadcast %cst_27 : f32 to vector<1x1xf32>
    %66 = arith.subf %51, %65 : vector<1x1xf32>
    %67 = vector.broadcast %0 : f32 to vector<1x1xf32>
    %68 = arith.mulf %67, %66 : vector<1x1xf32>
    %cst_28 = arith.constant 1.000000e+00 : f32
    %69 = vector.broadcast %cst_28 : f32 to vector<1x1xf32>
    %70 = arith.subf %54, %69 : vector<1x1xf32>
    %71 = arith.addf %68, %70 : vector<1x1xf32>
    %cst_29 = arith.constant 0.000000e+00 : f32
    %72 = arith.subf %cst_29, %1 : f32
    %cst_30 = arith.constant 1.000000e+01 : f32
    %73 = vector.broadcast %cst_30 : f32 to vector<1x1xf32>
    %74 = arith.mulf %73, %71 : vector<1x1xf32>
    %75 = math.tanh %74 : vector<1x1xf32>
    %76 = vector.broadcast %72 : f32 to vector<1x1xf32>
    %77 = arith.mulf %76, %75 : vector<1x1xf32>
    %cst_31 = arith.constant 6.250000e-02 : f32
    %78 = vector.broadcast %cst_31 : f32 to vector<1x1xf32>
    %79 = arith.mulf %78, %54 : vector<1x1xf32>
    %80 = arith.addf %51, %79 : vector<1x1xf32>
    %cst_32 = arith.constant 6.250000e-02 : f32
    %81 = vector.broadcast %cst_32 : f32 to vector<1x1xf32>
    %82 = arith.mulf %81, %77 : vector<1x1xf32>
    %83 = arith.addf %54, %82 : vector<1x1xf32>
    %cst_33 = arith.constant 1.875000e-01 : f32
    %84 = vector.broadcast %cst_33 : f32 to vector<1x1xf32>
    %85 = arith.subf %80, %84 : vector<1x1xf32>
    %cst_34 = arith.constant 1.000000e+00 : f32
    %86 = vector.broadcast %cst_34 : f32 to vector<1x1xf32>
    %87 = arith.subf %83, %86 : vector<1x1xf32>
    %88 = arith.mulf %85, %85 : vector<1x1xf32>
    %89 = arith.addf %62, %88 : vector<1x1xf32>
    %90 = arith.mulf %87, %87 : vector<1x1xf32>
    %91 = arith.addf %89, %90 : vector<1x1xf32>
    %92 = tpu.concatenate %80, %83 in 1 : vector<1x1xf32>, vector<1x1xf32> -> vector<1x2xf32>
    %c3 = arith.constant 3 : index
    %c0_35 = arith.constant 0 : index
    %93 = vector.load %arg2[%c3, %c0_35] : memref<17x2xf32, #tpu.memory_space<vmem>>, vector<1x2xf32>
    tpu.vector_store %arg2[%c3, %c0_35], %92 {strides = array<i32>} : memref<17x2xf32, #tpu.memory_space<vmem>>, vector<1x2xf32>,
    %cst_36 = arith.constant 2.500000e-01 : f32
    %94 = vector.broadcast %cst_36 : f32 to vector<1x1xf32>
    %95 = arith.subf %80, %94 : vector<1x1xf32>
    %96 = vector.broadcast %0 : f32 to vector<1x1xf32>
    %97 = arith.mulf %96, %95 : vector<1x1xf32>
    %cst_37 = arith.constant 1.000000e+00 : f32
    %98 = vector.broadcast %cst_37 : f32 to vector<1x1xf32>
    %99 = arith.subf %83, %98 : vector<1x1xf32>
    %100 = arith.addf %97, %99 : vector<1x1xf32>
    %cst_38 = arith.constant 0.000000e+00 : f32
    %101 = arith.subf %cst_38, %1 : f32
    %cst_39 = arith.constant 1.000000e+01 : f32
    %102 = vector.broadcast %cst_39 : f32 to vector<1x1xf32>
    %103 = arith.mulf %102, %100 : vector<1x1xf32>
    %104 = math.tanh %103 : vector<1x1xf32>
    %105 = vector.broadcast %101 : f32 to vector<1x1xf32>
    %106 = arith.mulf %105, %104 : vector<1x1xf32>
    %cst_40 = arith.constant 6.250000e-02 : f32
    %107 = vector.broadcast %cst_40 : f32 to vector<1x1xf32>
    %108 = arith.mulf %107, %83 : vector<1x1xf32>
    %109 = arith.addf %80, %108 : vector<1x1xf32>
    %cst_41 = arith.constant 6.250000e-02 : f32
    %110 = vector.broadcast %cst_41 : f32 to vector<1x1xf32>
    %111 = arith.mulf %110, %106 : vector<1x1xf32>
    %112 = arith.addf %83, %111 : vector<1x1xf32>
    %cst_42 = arith.constant 2.500000e-01 : f32
    %113 = vector.broadcast %cst_42 : f32 to vector<1x1xf32>
    %114 = arith.subf %109, %113 : vector<1x1xf32>
    %cst_43 = arith.constant 1.000000e+00 : f32
    %115 = vector.broadcast %cst_43 : f32 to vector<1x1xf32>
    %116 = arith.subf %112, %115 : vector<1x1xf32>
    %117 = arith.mulf %114, %114 : vector<1x1xf32>
    %118 = arith.addf %91, %117 : vector<1x1xf32>
    %119 = arith.mulf %116, %116 : vector<1x1xf32>
    %120 = arith.addf %118, %119 : vector<1x1xf32>
    %121 = tpu.concatenate %109, %112 in 1 : vector<1x1xf32>, vector<1x1xf32> -> vector<1x2xf32>
    %c4 = arith.constant 4 : index
    %c0_44 = arith.constant 0 : index
    %122 = vector.load %arg2[%c4, %c0_44] : memref<17x2xf32, #tpu.memory_space<vmem>>, vector<1x2xf32>
    tpu.vector_store %arg2[%c4, %c0_44], %121 {strides = array<i32>} : memref<17x2xf32, #tpu.memory_space<vmem>>, vector<1x2xf32>,
    %cst_45 = arith.constant 3.125000e-01 : f32
    %123 = vector.broadcast %cst_45 : f32 to vector<1x1xf32>
    %124 = arith.subf %109, %123 : vector<1x1xf32>
    %125 = vector.broadcast %0 : f32 to vector<1x1xf32>
    %126 = arith.mulf %125, %124 : vector<1x1xf32>
    %cst_46 = arith.constant 1.000000e+00 : f32
    %127 = vector.broadcast %cst_46 : f32 to vector<1x1xf32>
    %128 = arith.subf %112, %127 : vector<1x1xf32>
    %129 = arith.addf %126, %128 : vector<1x1xf32>
    %cst_47 = arith.constant 0.000000e+00 : f32
    %130 = arith.subf %cst_47, %1 : f32
    %cst_48 = arith.constant 1.000000e+01 : f32
    %131 = vector.broadcast %cst_48 : f32 to vector<1x1xf32>
    %132 = arith.mulf %131, %129 : vector<1x1xf32>
    %133 = math.tanh %132 : vector<1x1xf32>
    %134 = vector.broadcast %130 : f32 to vector<1x1xf32>
    %135 = arith.mulf %134, %133 : vector<1x1xf32>
    %cst_49 = arith.constant 6.250000e-02 : f32
    %136 = vector.broadcast %cst_49 : f32 to vector<1x1xf32>
    %137 = arith.mulf %136, %112 : vector<1x1xf32>
    %138 = arith.addf %109, %137 : vector<1x1xf32>
    %cst_50 = arith.constant 6.250000e-02 : f32
    %139 = vector.broadcast %cst_50 : f32 to vector<1x1xf32>
    %140 = arith.mulf %139, %135 : vector<1x1xf32>
    %141 = arith.addf %112, %140 : vector<1x1xf32>
    %cst_51 = arith.constant 3.125000e-01 : f32
    %142 = vector.broadcast %cst_51 : f32 to vector<1x1xf32>
    %143 = arith.subf %138, %142 : vector<1x1xf32>
    %cst_52 = arith.constant 1.000000e+00 : f32
    %144 = vector.broadcast %cst_52 : f32 to vector<1x1xf32>
    %145 = arith.subf %141, %144 : vector<1x1xf32>
    %146 = arith.mulf %143, %143 : vector<1x1xf32>
    %147 = arith.addf %120, %146 : vector<1x1xf32>
    %148 = arith.mulf %145, %145 : vector<1x1xf32>
    %149 = arith.addf %147, %148 : vector<1x1xf32>
    %150 = tpu.concatenate %138, %141 in 1 : vector<1x1xf32>, vector<1x1xf32> -> vector<1x2xf32>
    %c5 = arith.constant 5 : index
    %c0_53 = arith.constant 0 : index
    %151 = vector.load %arg2[%c5, %c0_53] : memref<17x2xf32, #tpu.memory_space<vmem>>, vector<1x2xf32>
    tpu.vector_store %arg2[%c5, %c0_53], %150 {strides = array<i32>} : memref<17x2xf32, #tpu.memory_space<vmem>>, vector<1x2xf32>,
    %cst_54 = arith.constant 3.750000e-01 : f32
    %152 = vector.broadcast %cst_54 : f32 to vector<1x1xf32>
    %153 = arith.subf %138, %152 : vector<1x1xf32>
    %154 = vector.broadcast %0 : f32 to vector<1x1xf32>
    %155 = arith.mulf %154, %153 : vector<1x1xf32>
    %cst_55 = arith.constant 1.000000e+00 : f32
    %156 = vector.broadcast %cst_55 : f32 to vector<1x1xf32>
    %157 = arith.subf %141, %156 : vector<1x1xf32>
    %158 = arith.addf %155, %157 : vector<1x1xf32>
    %cst_56 = arith.constant 0.000000e+00 : f32
    %159 = arith.subf %cst_56, %1 : f32
    %cst_57 = arith.constant 1.000000e+01 : f32
    %160 = vector.broadcast %cst_57 : f32 to vector<1x1xf32>
    %161 = arith.mulf %160, %158 : vector<1x1xf32>
    %162 = math.tanh %161 : vector<1x1xf32>
    %163 = vector.broadcast %159 : f32 to vector<1x1xf32>
    %164 = arith.mulf %163, %162 : vector<1x1xf32>
    %cst_58 = arith.constant 6.250000e-02 : f32
    %165 = vector.broadcast %cst_58 : f32 to vector<1x1xf32>
    %166 = arith.mulf %165, %141 : vector<1x1xf32>
    %167 = arith.addf %138, %166 : vector<1x1xf32>
    %cst_59 = arith.constant 6.250000e-02 : f32
    %168 = vector.broadcast %cst_59 : f32 to vector<1x1xf32>
    %169 = arith.mulf %168, %164 : vector<1x1xf32>
    %170 = arith.addf %141, %169 : vector<1x1xf32>
    %cst_60 = arith.constant 3.750000e-01 : f32
    %171 = vector.broadcast %cst_60 : f32 to vector<1x1xf32>
    %172 = arith.subf %167, %171 : vector<1x1xf32>
    %cst_61 = arith.constant 1.000000e+00 : f32
    %173 = vector.broadcast %cst_61 : f32 to vector<1x1xf32>
    %174 = arith.subf %170, %173 : vector<1x1xf32>
    %175 = arith.mulf %172, %172 : vector<1x1xf32>
    %176 = arith.addf %149, %175 : vector<1x1xf32>
    %177 = arith.mulf %174, %174 : vector<1x1xf32>
    %178 = arith.addf %176, %177 : vector<1x1xf32>
    %179 = tpu.concatenate %167, %170 in 1 : vector<1x1xf32>, vector<1x1xf32> -> vector<1x2xf32>
    %c6 = arith.constant 6 : index
    %c0_62 = arith.constant 0 : index
    %180 = vector.load %arg2[%c6, %c0_62] : memref<17x2xf32, #tpu.memory_space<vmem>>, vector<1x2xf32>
    tpu.vector_store %arg2[%c6, %c0_62], %179 {strides = array<i32>} : memref<17x2xf32, #tpu.memory_space<vmem>>, vector<1x2xf32>,
    %cst_63 = arith.constant 4.375000e-01 : f32
    %181 = vector.broadcast %cst_63 : f32 to vector<1x1xf32>
    %182 = arith.subf %167, %181 : vector<1x1xf32>
    %183 = vector.broadcast %0 : f32 to vector<1x1xf32>
    %184 = arith.mulf %183, %182 : vector<1x1xf32>
    %cst_64 = arith.constant 1.000000e+00 : f32
    %185 = vector.broadcast %cst_64 : f32 to vector<1x1xf32>
    %186 = arith.subf %170, %185 : vector<1x1xf32>
    %187 = arith.addf %184, %186 : vector<1x1xf32>
    %cst_65 = arith.constant 0.000000e+00 : f32
    %188 = arith.subf %cst_65, %1 : f32
    %cst_66 = arith.constant 1.000000e+01 : f32
    %189 = vector.broadcast %cst_66 : f32 to vector<1x1xf32>
    %190 = arith.mulf %189, %187 : vector<1x1xf32>
    %191 = math.tanh %190 : vector<1x1xf32>
    %192 = vector.broadcast %188 : f32 to vector<1x1xf32>
    %193 = arith.mulf %192, %191 : vector<1x1xf32>
    %cst_67 = arith.constant 6.250000e-02 : f32
    %194 = vector.broadcast %cst_67 : f32 to vector<1x1xf32>
    %195 = arith.mulf %194, %170 : vector<1x1xf32>
    %196 = arith.addf %167, %195 : vector<1x1xf32>
    %cst_68 = arith.constant 6.250000e-02 : f32
    %197 = vector.broadcast %cst_68 : f32 to vector<1x1xf32>
    %198 = arith.mulf %197, %193 : vector<1x1xf32>
    %199 = arith.addf %170, %198 : vector<1x1xf32>
    %cst_69 = arith.constant 4.375000e-01 : f32
    %200 = vector.broadcast %cst_69 : f32 to vector<1x1xf32>
    %201 = arith.subf %196, %200 : vector<1x1xf32>
    %cst_70 = arith.constant 1.000000e+00 : f32
    %202 = vector.broadcast %cst_70 : f32 to vector<1x1xf32>
    %203 = arith.subf %199, %202 : vector<1x1xf32>
    %204 = arith.mulf %201, %201 : vector<1x1xf32>
    %205 = arith.addf %178, %204 : vector<1x1xf32>
    %206 = arith.mulf %203, %203 : vector<1x1xf32>
    %207 = arith.addf %205, %206 : vector<1x1xf32>
    %208 = tpu.concatenate %196, %199 in 1 : vector<1x1xf32>, vector<1x1xf32> -> vector<1x2xf32>
    %c7 = arith.constant 7 : index
    %c0_71 = arith.constant 0 : index
    %209 = vector.load %arg2[%c7, %c0_71] : memref<17x2xf32, #tpu.memory_space<vmem>>, vector<1x2xf32>
    tpu.vector_store %arg2[%c7, %c0_71], %208 {strides = array<i32>} : memref<17x2xf32, #tpu.memory_space<vmem>>, vector<1x2xf32>,
    %cst_72 = arith.constant 5.000000e-01 : f32
    %210 = vector.broadcast %cst_72 : f32 to vector<1x1xf32>
    %211 = arith.subf %196, %210 : vector<1x1xf32>
    %212 = vector.broadcast %0 : f32 to vector<1x1xf32>
    %213 = arith.mulf %212, %211 : vector<1x1xf32>
    %cst_73 = arith.constant 1.000000e+00 : f32
    %214 = vector.broadcast %cst_73 : f32 to vector<1x1xf32>
    %215 = arith.subf %199, %214 : vector<1x1xf32>
    %216 = arith.addf %213, %215 : vector<1x1xf32>
    %cst_74 = arith.constant 0.000000e+00 : f32
    %217 = arith.subf %cst_74, %1 : f32
    %cst_75 = arith.constant 1.000000e+01 : f32
    %218 = vector.broadcast %cst_75 : f32 to vector<1x1xf32>
    %219 = arith.mulf %218, %216 : vector<1x1xf32>
    %220 = math.tanh %219 : vector<1x1xf32>
    %221 = vector.broadcast %217 : f32 to vector<1x1xf32>
    %222 = arith.mulf %221, %220 : vector<1x1xf32>
    %cst_76 = arith.constant 6.250000e-02 : f32
    %223 = vector.broadcast %cst_76 : f32 to vector<1x1xf32>
    %224 = arith.mulf %223, %199 : vector<1x1xf32>
    %225 = arith.addf %196, %224 : vector<1x1xf32>
    %cst_77 = arith.constant 6.250000e-02 : f32
    %226 = vector.broadcast %cst_77 : f32 to vector<1x1xf32>
    %227 = arith.mulf %226, %222 : vector<1x1xf32>
    %228 = arith.addf %199, %227 : vector<1x1xf32>
    %cst_78 = arith.constant 5.000000e-01 : f32
    %229 = vector.broadcast %cst_78 : f32 to vector<1x1xf32>
    %230 = arith.subf %225, %229 : vector<1x1xf32>
    %cst_79 = arith.constant 1.000000e+00 : f32
    %231 = vector.broadcast %cst_79 : f32 to vector<1x1xf32>
    %232 = arith.subf %228, %231 : vector<1x1xf32>
    %233 = arith.mulf %230, %230 : vector<1x1xf32>
    %234 = arith.addf %207, %233 : vector<1x1xf32>
    %235 = arith.mulf %232, %232 : vector<1x1xf32>
    %236 = arith.addf %234, %235 : vector<1x1xf32>
    %237 = tpu.concatenate %225, %228 in 1 : vector<1x1xf32>, vector<1x1xf32> -> vector<1x2xf32>
    %c8 = arith.constant 8 : index
    %c0_80 = arith.constant 0 : index
    %238 = vector.load %arg2[%c8, %c0_80] : memref<17x2xf32, #tpu.memory_space<vmem>>, vector<1x2xf32>
    tpu.vector_store %arg2[%c8, %c0_80], %237 {strides = array<i32>} : memref<17x2xf32, #tpu.memory_space<vmem>>, vector<1x2xf32>,
    %cst_81 = arith.constant 5.625000e-01 : f32
    %239 = vector.broadcast %cst_81 : f32 to vector<1x1xf32>
    %240 = arith.subf %225, %239 : vector<1x1xf32>
    %241 = vector.broadcast %0 : f32 to vector<1x1xf32>
    %242 = arith.mulf %241, %240 : vector<1x1xf32>
    %cst_82 = arith.constant 1.000000e+00 : f32
    %243 = vector.broadcast %cst_82 : f32 to vector<1x1xf32>
    %244 = arith.subf %228, %243 : vector<1x1xf32>
    %245 = arith.addf %242, %244 : vector<1x1xf32>
    %cst_83 = arith.constant 0.000000e+00 : f32
    %246 = arith.subf %cst_83, %1 : f32
    %cst_84 = arith.constant 1.000000e+01 : f32
    %247 = vector.broadcast %cst_84 : f32 to vector<1x1xf32>
    %248 = arith.mulf %247, %245 : vector<1x1xf32>
    %249 = math.tanh %248 : vector<1x1xf32>
    %250 = vector.broadcast %246 : f32 to vector<1x1xf32>
    %251 = arith.mulf %250, %249 : vector<1x1xf32>
    %cst_85 = arith.constant 6.250000e-02 : f32
    %252 = vector.broadcast %cst_85 : f32 to vector<1x1xf32>
    %253 = arith.mulf %252, %228 : vector<1x1xf32>
    %254 = arith.addf %225, %253 : vector<1x1xf32>
    %cst_86 = arith.constant 6.250000e-02 : f32
    %255 = vector.broadcast %cst_86 : f32 to vector<1x1xf32>
    %256 = arith.mulf %255, %251 : vector<1x1xf32>
    %257 = arith.addf %228, %256 : vector<1x1xf32>
    %cst_87 = arith.constant 5.625000e-01 : f32
    %258 = vector.broadcast %cst_87 : f32 to vector<1x1xf32>
    %259 = arith.subf %254, %258 : vector<1x1xf32>
    %cst_88 = arith.constant 1.000000e+00 : f32
    %260 = vector.broadcast %cst_88 : f32 to vector<1x1xf32>
    %261 = arith.subf %257, %260 : vector<1x1xf32>
    %262 = arith.mulf %259, %259 : vector<1x1xf32>
    %263 = arith.addf %236, %262 : vector<1x1xf32>
    %264 = arith.mulf %261, %261 : vector<1x1xf32>
    %265 = arith.addf %263, %264 : vector<1x1xf32>
    %266 = tpu.concatenate %254, %257 in 1 : vector<1x1xf32>, vector<1x1xf32> -> vector<1x2xf32>
    %c9 = arith.constant 9 : index
    %c0_89 = arith.constant 0 : index
    %267 = vector.load %arg2[%c9, %c0_89] : memref<17x2xf32, #tpu.memory_space<vmem>>, vector<1x2xf32>
    tpu.vector_store %arg2[%c9, %c0_89], %266 {strides = array<i32>} : memref<17x2xf32, #tpu.memory_space<vmem>>, vector<1x2xf32>,
    %cst_90 = arith.constant 6.250000e-01 : f32
    %268 = vector.broadcast %cst_90 : f32 to vector<1x1xf32>
    %269 = arith.subf %254, %268 : vector<1x1xf32>
    %270 = vector.broadcast %0 : f32 to vector<1x1xf32>
    %271 = arith.mulf %270, %269 : vector<1x1xf32>
    %cst_91 = arith.constant 1.000000e+00 : f32
    %272 = vector.broadcast %cst_91 : f32 to vector<1x1xf32>
    %273 = arith.subf %257, %272 : vector<1x1xf32>
    %274 = arith.addf %271, %273 : vector<1x1xf32>
    %cst_92 = arith.constant 0.000000e+00 : f32
    %275 = arith.subf %cst_92, %1 : f32
    %cst_93 = arith.constant 1.000000e+01 : f32
    %276 = vector.broadcast %cst_93 : f32 to vector<1x1xf32>
    %277 = arith.mulf %276, %274 : vector<1x1xf32>
    %278 = math.tanh %277 : vector<1x1xf32>
    %279 = vector.broadcast %275 : f32 to vector<1x1xf32>
    %280 = arith.mulf %279, %278 : vector<1x1xf32>
    %cst_94 = arith.constant 6.250000e-02 : f32
    %281 = vector.broadcast %cst_94 : f32 to vector<1x1xf32>
    %282 = arith.mulf %281, %257 : vector<1x1xf32>
    %283 = arith.addf %254, %282 : vector<1x1xf32>
    %cst_95 = arith.constant 6.250000e-02 : f32
    %284 = vector.broadcast %cst_95 : f32 to vector<1x1xf32>
    %285 = arith.mulf %284, %280 : vector<1x1xf32>
    %286 = arith.addf %257, %285 : vector<1x1xf32>
    %cst_96 = arith.constant 6.250000e-01 : f32
    %287 = vector.broadcast %cst_96 : f32 to vector<1x1xf32>
    %288 = arith.subf %283, %287 : vector<1x1xf32>
    %cst_97 = arith.constant 1.000000e+00 : f32
    %289 = vector.broadcast %cst_97 : f32 to vector<1x1xf32>
    %290 = arith.subf %286, %289 : vector<1x1xf32>
    %291 = arith.mulf %288, %288 : vector<1x1xf32>
    %292 = arith.addf %265, %291 : vector<1x1xf32>
    %293 = arith.mulf %290, %290 : vector<1x1xf32>
    %294 = arith.addf %292, %293 : vector<1x1xf32>
    %295 = tpu.concatenate %283, %286 in 1 : vector<1x1xf32>, vector<1x1xf32> -> vector<1x2xf32>
    %c10 = arith.constant 10 : index
    %c0_98 = arith.constant 0 : index
    %296 = vector.load %arg2[%c10, %c0_98] : memref<17x2xf32, #tpu.memory_space<vmem>>, vector<1x2xf32>
    tpu.vector_store %arg2[%c10, %c0_98], %295 {strides = array<i32>} : memref<17x2xf32, #tpu.memory_space<vmem>>, vector<1x2xf32>,
    %cst_99 = arith.constant 6.875000e-01 : f32
    %297 = vector.broadcast %cst_99 : f32 to vector<1x1xf32>
    %298 = arith.subf %283, %297 : vector<1x1xf32>
    %299 = vector.broadcast %0 : f32 to vector<1x1xf32>
    %300 = arith.mulf %299, %298 : vector<1x1xf32>
    %cst_100 = arith.constant 1.000000e+00 : f32
    %301 = vector.broadcast %cst_100 : f32 to vector<1x1xf32>
    %302 = arith.subf %286, %301 : vector<1x1xf32>
    %303 = arith.addf %300, %302 : vector<1x1xf32>
    %cst_101 = arith.constant 0.000000e+00 : f32
    %304 = arith.subf %cst_101, %1 : f32
    %cst_102 = arith.constant 1.000000e+01 : f32
    %305 = vector.broadcast %cst_102 : f32 to vector<1x1xf32>
    %306 = arith.mulf %305, %303 : vector<1x1xf32>
    %307 = math.tanh %306 : vector<1x1xf32>
    %308 = vector.broadcast %304 : f32 to vector<1x1xf32>
    %309 = arith.mulf %308, %307 : vector<1x1xf32>
    %cst_103 = arith.constant 6.250000e-02 : f32
    %310 = vector.broadcast %cst_103 : f32 to vector<1x1xf32>
    %311 = arith.mulf %310, %286 : vector<1x1xf32>
    %312 = arith.addf %283, %311 : vector<1x1xf32>
    %cst_104 = arith.constant 6.250000e-02 : f32
    %313 = vector.broadcast %cst_104 : f32 to vector<1x1xf32>
    %314 = arith.mulf %313, %309 : vector<1x1xf32>
    %315 = arith.addf %286, %314 : vector<1x1xf32>
    %cst_105 = arith.constant 6.875000e-01 : f32
    %316 = vector.broadcast %cst_105 : f32 to vector<1x1xf32>
    %317 = arith.subf %312, %316 : vector<1x1xf32>
    %cst_106 = arith.constant 1.000000e+00 : f32
    %318 = vector.broadcast %cst_106 : f32 to vector<1x1xf32>
    %319 = arith.subf %315, %318 : vector<1x1xf32>
    %320 = arith.mulf %317, %317 : vector<1x1xf32>
    %321 = arith.addf %294, %320 : vector<1x1xf32>
    %322 = arith.mulf %319, %319 : vector<1x1xf32>
    %323 = arith.addf %321, %322 : vector<1x1xf32>
    %324 = tpu.concatenate %312, %315 in 1 : vector<1x1xf32>, vector<1x1xf32> -> vector<1x2xf32>
    %c11 = arith.constant 11 : index
    %c0_107 = arith.constant 0 : index
    %325 = vector.load %arg2[%c11, %c0_107] : memref<17x2xf32, #tpu.memory_space<vmem>>, vector<1x2xf32>
    tpu.vector_store %arg2[%c11, %c0_107], %324 {strides = array<i32>} : memref<17x2xf32, #tpu.memory_space<vmem>>, vector<1x2xf32>,
    %cst_108 = arith.constant 7.500000e-01 : f32
    %326 = vector.broadcast %cst_108 : f32 to vector<1x1xf32>
    %327 = arith.subf %312, %326 : vector<1x1xf32>
    %328 = vector.broadcast %0 : f32 to vector<1x1xf32>
    %329 = arith.mulf %328, %327 : vector<1x1xf32>
    %cst_109 = arith.constant 1.000000e+00 : f32
    %330 = vector.broadcast %cst_109 : f32 to vector<1x1xf32>
    %331 = arith.subf %315, %330 : vector<1x1xf32>
    %332 = arith.addf %329, %331 : vector<1x1xf32>
    %cst_110 = arith.constant 0.000000e+00 : f32
    %333 = arith.subf %cst_110, %1 : f32
    %cst_111 = arith.constant 1.000000e+01 : f32
    %334 = vector.broadcast %cst_111 : f32 to vector<1x1xf32>
    %335 = arith.mulf %334, %332 : vector<1x1xf32>
    %336 = math.tanh %335 : vector<1x1xf32>
    %337 = vector.broadcast %333 : f32 to vector<1x1xf32>
    %338 = arith.mulf %337, %336 : vector<1x1xf32>
    %cst_112 = arith.constant 6.250000e-02 : f32
    %339 = vector.broadcast %cst_112 : f32 to vector<1x1xf32>
    %340 = arith.mulf %339, %315 : vector<1x1xf32>
    %341 = arith.addf %312, %340 : vector<1x1xf32>
    %cst_113 = arith.constant 6.250000e-02 : f32
    %342 = vector.broadcast %cst_113 : f32 to vector<1x1xf32>
    %343 = arith.mulf %342, %338 : vector<1x1xf32>
    %344 = arith.addf %315, %343 : vector<1x1xf32>
    %cst_114 = arith.constant 7.500000e-01 : f32
    %345 = vector.broadcast %cst_114 : f32 to vector<1x1xf32>
    %346 = arith.subf %341, %345 : vector<1x1xf32>
    %cst_115 = arith.constant 1.000000e+00 : f32
    %347 = vector.broadcast %cst_115 : f32 to vector<1x1xf32>
    %348 = arith.subf %344, %347 : vector<1x1xf32>
    %349 = arith.mulf %346, %346 : vector<1x1xf32>
    %350 = arith.addf %323, %349 : vector<1x1xf32>
    %351 = arith.mulf %348, %348 : vector<1x1xf32>
    %352 = arith.addf %350, %351 : vector<1x1xf32>
    %353 = tpu.concatenate %341, %344 in 1 : vector<1x1xf32>, vector<1x1xf32> -> vector<1x2xf32>
    %c12 = arith.constant 12 : index
    %c0_116 = arith.constant 0 : index
    %354 = vector.load %arg2[%c12, %c0_116] : memref<17x2xf32, #tpu.memory_space<vmem>>, vector<1x2xf32>
    tpu.vector_store %arg2[%c12, %c0_116], %353 {strides = array<i32>} : memref<17x2xf32, #tpu.memory_space<vmem>>, vector<1x2xf32>,
    %cst_117 = arith.constant 8.125000e-01 : f32
    %355 = vector.broadcast %cst_117 : f32 to vector<1x1xf32>
    %356 = arith.subf %341, %355 : vector<1x1xf32>
    %357 = vector.broadcast %0 : f32 to vector<1x1xf32>
    %358 = arith.mulf %357, %356 : vector<1x1xf32>
    %cst_118 = arith.constant 1.000000e+00 : f32
    %359 = vector.broadcast %cst_118 : f32 to vector<1x1xf32>
    %360 = arith.subf %344, %359 : vector<1x1xf32>
    %361 = arith.addf %358, %360 : vector<1x1xf32>
    %cst_119 = arith.constant 0.000000e+00 : f32
    %362 = arith.subf %cst_119, %1 : f32
    %cst_120 = arith.constant 1.000000e+01 : f32
    %363 = vector.broadcast %cst_120 : f32 to vector<1x1xf32>
    %364 = arith.mulf %363, %361 : vector<1x1xf32>
    %365 = math.tanh %364 : vector<1x1xf32>
    %366 = vector.broadcast %362 : f32 to vector<1x1xf32>
    %367 = arith.mulf %366, %365 : vector<1x1xf32>
    %cst_121 = arith.constant 6.250000e-02 : f32
    %368 = vector.broadcast %cst_121 : f32 to vector<1x1xf32>
    %369 = arith.mulf %368, %344 : vector<1x1xf32>
    %370 = arith.addf %341, %369 : vector<1x1xf32>
    %cst_122 = arith.constant 6.250000e-02 : f32
    %371 = vector.broadcast %cst_122 : f32 to vector<1x1xf32>
    %372 = arith.mulf %371, %367 : vector<1x1xf32>
    %373 = arith.addf %344, %372 : vector<1x1xf32>
    %cst_123 = arith.constant 8.125000e-01 : f32
    %374 = vector.broadcast %cst_123 : f32 to vector<1x1xf32>
    %375 = arith.subf %370, %374 : vector<1x1xf32>
    %cst_124 = arith.constant 1.000000e+00 : f32
    %376 = vector.broadcast %cst_124 : f32 to vector<1x1xf32>
    %377 = arith.subf %373, %376 : vector<1x1xf32>
    %378 = arith.mulf %375, %375 : vector<1x1xf32>
    %379 = arith.addf %352, %378 : vector<1x1xf32>
    %380 = arith.mulf %377, %377 : vector<1x1xf32>
    %381 = arith.addf %379, %380 : vector<1x1xf32>
    %382 = tpu.concatenate %370, %373 in 1 : vector<1x1xf32>, vector<1x1xf32> -> vector<1x2xf32>
    %c13 = arith.constant 13 : index
    %c0_125 = arith.constant 0 : index
    %383 = vector.load %arg2[%c13, %c0_125] : memref<17x2xf32, #tpu.memory_space<vmem>>, vector<1x2xf32>
    tpu.vector_store %arg2[%c13, %c0_125], %382 {strides = array<i32>} : memref<17x2xf32, #tpu.memory_space<vmem>>, vector<1x2xf32>,
    %cst_126 = arith.constant 8.750000e-01 : f32
    %384 = vector.broadcast %cst_126 : f32 to vector<1x1xf32>
    %385 = arith.subf %370, %384 : vector<1x1xf32>
    %386 = vector.broadcast %0 : f32 to vector<1x1xf32>
    %387 = arith.mulf %386, %385 : vector<1x1xf32>
    %cst_127 = arith.constant 1.000000e+00 : f32
    %388 = vector.broadcast %cst_127 : f32 to vector<1x1xf32>
    %389 = arith.subf %373, %388 : vector<1x1xf32>
    %390 = arith.addf %387, %389 : vector<1x1xf32>
    %cst_128 = arith.constant 0.000000e+00 : f32
    %391 = arith.subf %cst_128, %1 : f32
    %cst_129 = arith.constant 1.000000e+01 : f32
    %392 = vector.broadcast %cst_129 : f32 to vector<1x1xf32>
    %393 = arith.mulf %392, %390 : vector<1x1xf32>
    %394 = math.tanh %393 : vector<1x1xf32>
    %395 = vector.broadcast %391 : f32 to vector<1x1xf32>
    %396 = arith.mulf %395, %394 : vector<1x1xf32>
    %cst_130 = arith.constant 6.250000e-02 : f32
    %397 = vector.broadcast %cst_130 : f32 to vector<1x1xf32>
    %398 = arith.mulf %397, %373 : vector<1x1xf32>
    %399 = arith.addf %370, %398 : vector<1x1xf32>
    %cst_131 = arith.constant 6.250000e-02 : f32
    %400 = vector.broadcast %cst_131 : f32 to vector<1x1xf32>
    %401 = arith.mulf %400, %396 : vector<1x1xf32>
    %402 = arith.addf %373, %401 : vector<1x1xf32>
    %cst_132 = arith.constant 8.750000e-01 : f32
    %403 = vector.broadcast %cst_132 : f32 to vector<1x1xf32>
    %404 = arith.subf %399, %403 : vector<1x1xf32>
    %cst_133 = arith.constant 1.000000e+00 : f32
    %405 = vector.broadcast %cst_133 : f32 to vector<1x1xf32>
    %406 = arith.subf %402, %405 : vector<1x1xf32>
    %407 = arith.mulf %404, %404 : vector<1x1xf32>
    %408 = arith.addf %381, %407 : vector<1x1xf32>
    %409 = arith.mulf %406, %406 : vector<1x1xf32>
    %410 = arith.addf %408, %409 : vector<1x1xf32>
    %411 = tpu.concatenate %399, %402 in 1 : vector<1x1xf32>, vector<1x1xf32> -> vector<1x2xf32>
    %c14 = arith.constant 14 : index
    %c0_134 = arith.constant 0 : index
    %412 = vector.load %arg2[%c14, %c0_134] : memref<17x2xf32, #tpu.memory_space<vmem>>, vector<1x2xf32>
    tpu.vector_store %arg2[%c14, %c0_134], %411 {strides = array<i32>} : memref<17x2xf32, #tpu.memory_space<vmem>>, vector<1x2xf32>,
    %cst_135 = arith.constant 9.375000e-01 : f32
    %413 = vector.broadcast %cst_135 : f32 to vector<1x1xf32>
    %414 = arith.subf %399, %413 : vector<1x1xf32>
    %415 = vector.broadcast %0 : f32 to vector<1x1xf32>
    %416 = arith.mulf %415, %414 : vector<1x1xf32>
    %cst_136 = arith.constant 1.000000e+00 : f32
    %417 = vector.broadcast %cst_136 : f32 to vector<1x1xf32>
    %418 = arith.subf %402, %417 : vector<1x1xf32>
    %419 = arith.addf %416, %418 : vector<1x1xf32>
    %cst_137 = arith.constant 0.000000e+00 : f32
    %420 = arith.subf %cst_137, %1 : f32
    %cst_138 = arith.constant 1.000000e+01 : f32
    %421 = vector.broadcast %cst_138 : f32 to vector<1x1xf32>
    %422 = arith.mulf %421, %419 : vector<1x1xf32>
    %423 = math.tanh %422 : vector<1x1xf32>
    %424 = vector.broadcast %420 : f32 to vector<1x1xf32>
    %425 = arith.mulf %424, %423 : vector<1x1xf32>
    %cst_139 = arith.constant 6.250000e-02 : f32
    %426 = vector.broadcast %cst_139 : f32 to vector<1x1xf32>
    %427 = arith.mulf %426, %402 : vector<1x1xf32>
    %428 = arith.addf %399, %427 : vector<1x1xf32>
    %cst_140 = arith.constant 6.250000e-02 : f32
    %429 = vector.broadcast %cst_140 : f32 to vector<1x1xf32>
    %430 = arith.mulf %429, %425 : vector<1x1xf32>
    %431 = arith.addf %402, %430 : vector<1x1xf32>
    %cst_141 = arith.constant 9.375000e-01 : f32
    %432 = vector.broadcast %cst_141 : f32 to vector<1x1xf32>
    %433 = arith.subf %428, %432 : vector<1x1xf32>
    %cst_142 = arith.constant 1.000000e+00 : f32
    %434 = vector.broadcast %cst_142 : f32 to vector<1x1xf32>
    %435 = arith.subf %431, %434 : vector<1x1xf32>
    %436 = arith.mulf %433, %433 : vector<1x1xf32>
    %437 = arith.addf %410, %436 : vector<1x1xf32>
    %438 = arith.mulf %435, %435 : vector<1x1xf32>
    %439 = arith.addf %437, %438 : vector<1x1xf32>
    %440 = tpu.concatenate %428, %431 in 1 : vector<1x1xf32>, vector<1x1xf32> -> vector<1x2xf32>
    %c15 = arith.constant 15 : index
    %c0_143 = arith.constant 0 : index
    %441 = vector.load %arg2[%c15, %c0_143] : memref<17x2xf32, #tpu.memory_space<vmem>>, vector<1x2xf32>
    tpu.vector_store %arg2[%c15, %c0_143], %440 {strides = array<i32>} : memref<17x2xf32, #tpu.memory_space<vmem>>, vector<1x2xf32>,
    %cst_144 = arith.constant 1.000000e+00 : f32
    %442 = vector.broadcast %cst_144 : f32 to vector<1x1xf32>
    %443 = arith.subf %428, %442 : vector<1x1xf32>
    %444 = vector.broadcast %0 : f32 to vector<1x1xf32>
    %445 = arith.mulf %444, %443 : vector<1x1xf32>
    %cst_145 = arith.constant 1.000000e+00 : f32
    %446 = vector.broadcast %cst_145 : f32 to vector<1x1xf32>
    %447 = arith.subf %431, %446 : vector<1x1xf32>
    %448 = arith.addf %445, %447 : vector<1x1xf32>
    %cst_146 = arith.constant 0.000000e+00 : f32
    %449 = arith.subf %cst_146, %1 : f32
    %cst_147 = arith.constant 1.000000e+01 : f32
    %450 = vector.broadcast %cst_147 : f32 to vector<1x1xf32>
    %451 = arith.mulf %450, %448 : vector<1x1xf32>
    %452 = math.tanh %451 : vector<1x1xf32>
    %453 = vector.broadcast %449 : f32 to vector<1x1xf32>
    %454 = arith.mulf %453, %452 : vector<1x1xf32>
    %cst_148 = arith.constant 6.250000e-02 : f32
    %455 = vector.broadcast %cst_148 : f32 to vector<1x1xf32>
    %456 = arith.mulf %455, %431 : vector<1x1xf32>
    %457 = arith.addf %428, %456 : vector<1x1xf32>
    %cst_149 = arith.constant 6.250000e-02 : f32
    %458 = vector.broadcast %cst_149 : f32 to vector<1x1xf32>
    %459 = arith.mulf %458, %454 : vector<1x1xf32>
    %460 = arith.addf %431, %459 : vector<1x1xf32>
    %cst_150 = arith.constant 1.000000e+00 : f32
    %461 = vector.broadcast %cst_150 : f32 to vector<1x1xf32>
    %462 = arith.subf %457, %461 : vector<1x1xf32>
    %cst_151 = arith.constant 1.000000e+00 : f32
    %463 = vector.broadcast %cst_151 : f32 to vector<1x1xf32>
    %464 = arith.subf %460, %463 : vector<1x1xf32>
    %465 = arith.mulf %462, %462 : vector<1x1xf32>
    %466 = arith.addf %439, %465 : vector<1x1xf32>
    %467 = arith.mulf %464, %464 : vector<1x1xf32>
    %468 = arith.addf %466, %467 : vector<1x1xf32>
    %469 = tpu.concatenate %457, %460 in 1 : vector<1x1xf32>, vector<1x1xf32> -> vector<1x2xf32>
    %c16 = arith.constant 16 : index
    %c0_152 = arith.constant 0 : index
    %470 = vector.load %arg2[%c16, %c0_152] : memref<17x2xf32, #tpu.memory_space<vmem>>, vector<1x2xf32>
    tpu.vector_store %arg2[%c16, %c0_152], %469 {strides = array<i32>} : memref<17x2xf32, #tpu.memory_space<vmem>>, vector<1x2xf32>,
    %c0_153 = arith.constant 0 : index
    %c0_154 = arith.constant 0 : index
    %471 = vector.load %arg3[%c0_153, %c0_154] : memref<1x1xf32, #tpu.memory_space<vmem>>, vector<1x1xf32>
    tpu.vector_store %arg3[%c0_153, %c0_154], %468 {strides = array<i32>} : memref<1x1xf32, #tpu.memory_space<vmem>>, vector<1x1xf32>,
    return
  }
}

</mosaic_0001>

<llo_original>
// kernel: tpu_custom_call.1
$region0: #{tpu_custom_call.1}
  #allocation0 [shape = 'u32[]', space=smem, size = 0x4, offset = 0x4, fixed_abs, tag = 'smem constant byte address 0x4 - core index']
  #allocation1 [shape = 'u32[144,128]{1,0:T(1,128)}', space=vmem, size = 0x12000, scoped, tag = 'internal scratch']
  %s0 = inlined_call_operand.hbm [shape: f32[1,2], index: 0, kind: input, shape index: {}]
  %s1 = inlined_call_operand.vmem [shape: f32[2], index: 1, kind: input, shape index: {}]
  %s2 = inlined_call_operand.vmem [shape: f32[17,2], index: 2, kind: output, shape index: {0}]
  %s3 = inlined_call_operand.hbm [shape: f32[1,1], index: 3, kind: output, shape index: {1}]
  %4 = xla_tuple %s2, %s3
  %s5 = sld [smem:[#allocation0]]
  $region34: #{tpu_custom_call.1} parent=0
    _
  %s7 = ssub.s32 1, %s5
  %s8 = scalar_select 0, %s7, %s5
  $region1: #{tpu_custom_call.1} parent=0
    #allocation2 [shape = 'u8[512]{0}', space=vmem, size = 0x400, scoped, tag = 'input window, operand 0, single buffered']
    #allocation3 [shape = 's32[1]{0}', space=sflag, size = 0x4, scoped, tag = 'scoped memory for tpu_custom_call.1']
    #allocation4 [shape = 's32[1]{0}', space=sflag, size = 0x4, scoped, tag = 'scoped memory for tpu_custom_call.1']
    #allocation5 [shape = 's32[1]{0}', space=sflag, size = 0x4, scoped, tag = 'scoped memory for tpu_custom_call.1']
    #allocation6 [shape = 'u8[512]{0}', space=smem, size = 0x200, scoped, tag = 'input window, operand 1, single buffered']
    #allocation7 [shape = 'u8[512]{0}', space=vmem, size = 0x400, scoped, tag = 'output window, operand 1, single buffered']
    %9 = vsyncpa [#allocation3], 0
    %10 = vsyncpa [#allocation5], 0
    %11 = vsyncpa [#allocation4], 0
    // Predicated region
    $region2: #{tpu_custom_call.1} parent=1 // pred_check
      _
    $region3: #{tpu_custom_call.1} parent=1 // pred_check_branch
      %13 = sbr.rel (0) target = $region5
    $region4: #{tpu_custom_call.1} parent=1 // pred_region
      %s15 = ssub.s32 16, 16
      %16 = vsyncadd [#allocation3], %s15
      %s18 = sshll.u32 [#allocation2], 4
      %s19 = int_to_ptr.vmem [resolvable:$true] %s18
      %21 = dma.hbm_to_vmem [thread:$0]  %s0, 16, %s19, [#allocation3]
    $region5: #{tpu_custom_call.1} parent=1 // pred_fallthru
      _
    // Predicated region
    $region6: #{tpu_custom_call.1} parent=1 // pred_check
      _
    $region7: #{tpu_custom_call.1} parent=1 // pred_check_branch
      %23 = sbr.rel (0) target = $region9
    $region8: #{tpu_custom_call.1} parent=1 // pred_region
      %s25 = ssub.s32 16, 16
      %26 = vsyncadd [#allocation5], %s25
      %s28 = sshll.u32 %s1, 4
      %s29 = int_to_ptr.vmem [resolvable:$true] %s28
      %31 = dma.vmem_to_smem %s29, 16, [#allocation6], [#allocation5]
    $region9: #{tpu_custom_call.1} parent=1 // pred_fallthru
      _
    // Predicated region
    $region10: #{tpu_custom_call.1} parent=1 // pred_check
      _
    $region11: #{tpu_custom_call.1} parent=1 // pred_check_branch
      %33 = sbr.rel (0) target = $region13
    $region12: #{tpu_custom_call.1} parent=1 // pred_region
      %34 = dma.done [#allocation3], 16
    $region13: #{tpu_custom_call.1} parent=1 // pred_fallthru
      _
    // Predicated region
    $region14: #{tpu_custom_call.1} parent=1 // pred_check
      _
    $region15: #{tpu_custom_call.1} parent=1 // pred_check_branch
      %36 = sbr.rel (0) target = $region17
    $region16: #{tpu_custom_call.1} parent=1 // pred_region
      %37 = dma.done [#allocation5], 16
    $region17: #{tpu_custom_call.1} parent=1 // pred_fallthru
      _
    %38 = sfence
    %s39 = sld [smem:[#allocation6]]
    %s40 = sld [smem:[#allocation6 + $0x1]]
    %v41 = vld [vmem:[#allocation2] sm:$0x1]
    %vm42 = vcmask 8192
    %43 = vst.msk [vmem:[%s2] sm:$0x1] %vm42, %v41
    %v44 = vld [vmem:[#allocation2] sm:$0x1]
    %v45 = vsub.f32 %v44, 0.0625
    %v46 = vstv %s39
    %v47 = vmul.f32 %v46, %v45
    %v48 = vsub.f32 %v44, 1.0
    %50 = vrot.lane.b32.xlu0 %v48, 127
    %v51 = vpop.permute.xlu0 %50
    %v53 = vadd.f32 %v47, %v51
    %s54 = ssub.f32 0.0, %s40
    %v55 = vmul.f32 %v53, 10.0
    %v56 = vtanh.pop %v55
    %v57 = vstv %s54
    %v58 = vmul.f32 %v57, %v56
    %v59 = vmul.f32 %v44, 0.0625
    %61 = vrot.lane.b32.xlu0 %v59, 127
    %v62 = vpop.permute.xlu0 %61
    %v64 = vadd.f32 %v44, %v62
    %v65 = vmul.f32 %v58, 0.0625
    %67 = vrot.lane.b32.xlu0 %v65, 1
    %v68 = vpop.permute.xlu0 %67
    %v70 = vadd.f32 %v44, %v68
    %v71 = vsub.f32 %v64, 0.0625
    %v72 = vsub.f32 %v70, 1.0
    %v73 = vmul.f32 %v71, %v71
    %v74 = vadd.f32 %v73, 0.0
    %v75 = vmul.f32 %v72, %v72
    %77 = vrot.lane.b32.xlu0 %v75, 127
    %v78 = vpop.permute.xlu0 %77
    %v80 = vadd.f32 %v74, %v78
    %vm81 = vcmask 7168
    %v82 = vsel %vm81, %v64, %v70
    %83 = vst.msk [vmem:[%s2 + $0x1] sm:$0x1] %vm42, %v82
    %v84 = vsub.f32 %v64, 0.125
    %v85 = vmul.f32 %v46, %v84
    %87 = vrot.lane.b32.xlu0 %v72, 127
    %v88 = vpop.permute.xlu0 %87
    %v90 = vadd.f32 %v85, %v88
    %v91 = vmul.f32 %v90, 10.0
    %v92 = vtanh.pop %v91
    %v93 = vmul.f32 %v57, %v92
    %v94 = vmul.f32 %v70, 0.0625
    %96 = vrot.lane.b32.xlu0 %v94, 127
    %v97 = vpop.permute.xlu0 %96
    %v99 = vadd.f32 %v64, %v97
    %v100 = vmul.f32 %v93, 0.0625
    %102 = vrot.lane.b32.xlu0 %v100, 1
    %v103 = vpop.permute.xlu0 %102
    %v105 = vadd.f32 %v70, %v103
    %v106 = vsub.f32 %v99, 0.125
    %v107 = vsub.f32 %v105, 1.0
    %v108 = vmul.f32 %v106, %v106
    %v109 = vadd.f32 %v80, %v108
    %v110 = vmul.f32 %v107, %v107
    %112 = vrot.lane.b32.xlu0 %v110, 127
    %v113 = vpop.permute.xlu0 %112
    %v115 = vadd.f32 %v109, %v113
    %v116 = vsel %vm81, %v99, %v105
    %117 = vst.msk [vmem:[%s2 + $0x2] sm:$0x1] %vm42, %v116
    %v118 = vsub.f32 %v99, 0.1875
    %v119 = vmul.f32 %v46, %v118
    %121 = vrot.lane.b32.xlu0 %v107, 127
    %v122 = vpop.permute.xlu0 %121
    %v124 = vadd.f32 %v119, %v122
    %v125 = vmul.f32 %v124, 10.0
    %v126 = vtanh.pop %v125
    %v127 = vmul.f32 %v57, %v126
    %v128 = vmul.f32 %v105, 0.0625
    %130 = vrot.lane.b32.xlu0 %v128, 127
    %v131 = vpop.permute.xlu0 %130
    %v133 = vadd.f32 %v99, %v131
    %v134 = vmul.f32 %v127, 0.0625
    %136 = vrot.lane.b32.xlu0 %v134, 1
    %v137 = vpop.permute.xlu0 %136
    %v139 = vadd.f32 %v105, %v137
    %v140 = vsub.f32 %v133, 0.1875
    %v141 = vsub.f32 %v139, 1.0
    %v142 = vmul.f32 %v140, %v140
    %v143 = vadd.f32 %v115, %v142
    %v144 = vmul.f32 %v141, %v141
    %146 = vrot.lane.b32.xlu0 %v144, 127
    %v147 = vpop.permute.xlu0 %146
    %v149 = vadd.f32 %v143, %v147
    %v150 = vsel %vm81, %v133, %v139
    %151 = vst.msk [vmem:[%s2 + $0x3] sm:$0x1] %vm42, %v150
    %v152 = vsub.f32 %v133, 0.25
    %v153 = vmul.f32 %v46, %v152
    %155 = vrot.lane.b32.xlu0 %v141, 127
    %v156 = vpop.permute.xlu0 %155
    %v158 = vadd.f32 %v153, %v156
    %v159 = vmul.f32 %v158, 10.0
    %v160 = vtanh.pop %v159
    %v161 = vmul.f32 %v57, %v160
    %v162 = vmul.f32 %v139, 0.0625
    %164 = vrot.lane.b32.xlu0 %v162, 127
    %v165 = vpop.permute.xlu0 %164
    %v167 = vadd.f32 %v133, %v165
    %v168 = vmul.f32 %v161, 0.0625
    %170 = vrot.lane.b32.xlu0 %v168, 1
    %v171 = vpop.permute.xlu0 %170
    %v173 = vadd.f32 %v139, %v171
    %v174 = vsub.f32 %v167, 0.25
    %v175 = vsub.f32 %v173, 1.0
    %v176 = vmul.f32 %v174, %v174
    %v177 = vadd.f32 %v149, %v176
    %v178 = vmul.f32 %v175, %v175
    %180 = vrot.lane.b32.xlu0 %v178, 127
    %v181 = vpop.permute.xlu0 %180
    %v183 = vadd.f32 %v177, %v181
    %v184 = vsel %vm81, %v167, %v173
    %185 = vst.msk [vmem:[%s2 + $0x4] sm:$0x1] %vm42, %v184
    %v186 = vsub.f32 %v167, 0.3125
    %v187 = vmul.f32 %v46, %v186
    %189 = vrot.lane.b32.xlu0 %v175, 127
    %v190 = vpop.permute.xlu0 %189
    %v192 = vadd.f32 %v187, %v190
    %v193 = vmul.f32 %v192, 10.0
    %v194 = vtanh.pop %v193
    %v195 = vmul.f32 %v57, %v194
    %v196 = vmul.f32 %v173, 0.0625
    %198 = vrot.lane.b32.xlu0 %v196, 127
    %v199 = vpop.permute.xlu0 %198
    %v201 = vadd.f32 %v167, %v199
    %v202 = vmul.f32 %v195, 0.0625
    %204 = vrot.lane.b32.xlu0 %v202, 1
    %v205 = vpop.permute.xlu0 %204
    %v207 = vadd.f32 %v173, %v205
    %v208 = vsub.f32 %v201, 0.3125
    %v209 = vsub.f32 %v207, 1.0
    %v210 = vmul.f32 %v208, %v208
    %v211 = vadd.f32 %v183, %v210
    %v212 = vmul.f32 %v209, %v209
    %214 = vrot.lane.b32.xlu0 %v212, 127
    %v215 = vpop.permute.xlu0 %214
    %v217 = vadd.f32 %v211, %v215
    %v218 = vsel %vm81, %v201, %v207
    %219 = vst.msk [vmem:[%s2 + $0x5] sm:$0x1] %vm42, %v218
    %v220 = vsub.f32 %v201, 0.375
    %v221 = vmul.f32 %v46, %v220
    %223 = vrot.lane.b32.xlu0 %v209, 127
    %v224 = vpop.permute.xlu0 %223
    %v226 = vadd.f32 %v221, %v224
    %v227 = vmul.f32 %v226, 10.0
    %v228 = vtanh.pop %v227
    %v229 = vmul.f32 %v57, %v228
    %v230 = vmul.f32 %v207, 0.0625
    %232 = vrot.lane.b32.xlu0 %v230, 127
    %v233 = vpop.permute.xlu0 %232
    %v235 = vadd.f32 %v201, %v233
    %v236 = vmul.f32 %v229, 0.0625
    %238 = vrot.lane.b32.xlu0 %v236, 1
    %v239 = vpop.permute.xlu0 %238
    %v241 = vadd.f32 %v207, %v239
    %v242 = vsub.f32 %v235, 0.375
    %v243 = vsub.f32 %v241, 1.0
    %v244 = vmul.f32 %v242, %v242
    %v245 = vadd.f32 %v217, %v244
    %v246 = vmul.f32 %v243, %v243
    %248 = vrot.lane.b32.xlu0 %v246, 127
    %v249 = vpop.permute.xlu0 %248
    %v251 = vadd.f32 %v245, %v249
    %v252 = vsel %vm81, %v235, %v241
    %253 = vst.msk [vmem:[%s2 + $0x6] sm:$0x1] %vm42, %v252
    %v254 = vsub.f32 %v235, 0.4375
    %v255 = vmul.f32 %v46, %v254
    %257 = vrot.lane.b32.xlu0 %v243, 127
    %v258 = vpop.permute.xlu0 %257
    %v260 = vadd.f32 %v255, %v258
    %v261 = vmul.f32 %v260, 10.0
    %v262 = vtanh.pop %v261
    %v263 = vmul.f32 %v57, %v262
    %v264 = vmul.f32 %v241, 0.0625
    %266 = vrot.lane.b32.xlu0 %v264, 127
    %v267 = vpop.permute.xlu0 %266
    %v269 = vadd.f32 %v235, %v267
    %v270 = vmul.f32 %v263, 0.0625
    %272 = vrot.lane.b32.xlu0 %v270, 1
    %v273 = vpop.permute.xlu0 %272
    %v275 = vadd.f32 %v241, %v273
    %v276 = vsub.f32 %v269, 0.4375
    %v277 = vsub.f32 %v275, 1.0
    %v278 = vmul.f32 %v276, %v276
    %v279 = vadd.f32 %v251, %v278
    %v280 = vmul.f32 %v277, %v277
    %282 = vrot.lane.b32.xlu0 %v280, 127
    %v283 = vpop.permute.xlu0 %282
    %v285 = vadd.f32 %v279, %v283
    %v286 = vsel %vm81, %v269, %v275
    %287 = vst.msk [vmem:[%s2 + $0x7] sm:$0x1] %vm42, %v286
    %v288 = vsub.f32 %v269, 0.5
    %v289 = vmul.f32 %v46, %v288
    %291 = vrot.lane.b32.xlu0 %v277, 127
    %v292 = vpop.permute.xlu0 %291
    %v294 = vadd.f32 %v289, %v292
    %v295 = vmul.f32 %v294, 10.0
    %v296 = vtanh.pop %v295
    %v297 = vmul.f32 %v57, %v296
    %v298 = vmul.f32 %v275, 0.0625
    %300 = vrot.lane.b32.xlu0 %v298, 127
    %v301 = vpop.permute.xlu0 %300
    %v303 = vadd.f32 %v269, %v301
    %v304 = vmul.f32 %v297, 0.0625
    %306 = vrot.lane.b32.xlu0 %v304, 1
    %v307 = vpop.permute.xlu0 %306
    %v309 = vadd.f32 %v275, %v307
    %v310 = vsub.f32 %v303, 0.5
    %v311 = vsub.f32 %v309, 1.0
    %v312 = vmul.f32 %v310, %v310
    %v313 = vadd.f32 %v285, %v312
    %v314 = vmul.f32 %v311, %v311
    %316 = vrot.lane.b32.xlu0 %v314, 127
    %v317 = vpop.permute.xlu0 %316
    %v319 = vadd.f32 %v313, %v317
    %v320 = vsel %vm81, %v303, %v309
    %321 = vst.msk [vmem:[%s2 + $0x8] sm:$0x1] %vm42, %v320
    %v322 = vsub.f32 %v303, 0.5625
    %v323 = vmul.f32 %v46, %v322
    %325 = vrot.lane.b32.xlu0 %v311, 127
    %v326 = vpop.permute.xlu0 %325
    %v328 = vadd.f32 %v323, %v326
    %v329 = vmul.f32 %v328, 10.0
    %v330 = vtanh.pop %v329
    %v331 = vmul.f32 %v57, %v330
    %v332 = vmul.f32 %v309, 0.0625
    %334 = vrot.lane.b32.xlu0 %v332, 127
    %v335 = vpop.permute.xlu0 %334
    %v337 = vadd.f32 %v303, %v335
    %v338 = vmul.f32 %v331, 0.0625
    %340 = vrot.lane.b32.xlu0 %v338, 1
    %v341 = vpop.permute.xlu0 %340
    %v343 = vadd.f32 %v309, %v341
    %v344 = vsub.f32 %v337, 0.5625
    %v345 = vsub.f32 %v343, 1.0
    %v346 = vmul.f32 %v344, %v344
    %v347 = vadd.f32 %v319, %v346
    %v348 = vmul.f32 %v345, %v345
    %350 = vrot.lane.b32.xlu0 %v348, 127
    %v351 = vpop.permute.xlu0 %350
    %v353 = vadd.f32 %v347, %v351
    %v354 = vsel %vm81, %v337, %v343
    %355 = vst.msk [vmem:[%s2 + $0x9] sm:$0x1] %vm42, %v354
    %v356 = vsub.f32 %v337, 0.625
    %v357 = vmul.f32 %v46, %v356
    %359 = vrot.lane.b32.xlu0 %v345, 127
    %v360 = vpop.permute.xlu0 %359
    %v362 = vadd.f32 %v357, %v360
    %v363 = vmul.f32 %v362, 10.0
    %v364 = vtanh.pop %v363
    %v365 = vmul.f32 %v57, %v364
    %v366 = vmul.f32 %v343, 0.0625
    %368 = vrot.lane.b32.xlu0 %v366, 127
    %v369 = vpop.permute.xlu0 %368
    %v371 = vadd.f32 %v337, %v369
    %v372 = vmul.f32 %v365, 0.0625
    %374 = vrot.lane.b32.xlu0 %v372, 1
    %v375 = vpop.permute.xlu0 %374
    %v377 = vadd.f32 %v343, %v375
    %v378 = vsub.f32 %v371, 0.625
    %v379 = vsub.f32 %v377, 1.0
    %v380 = vmul.f32 %v378, %v378
    %v381 = vadd.f32 %v353, %v380
    %v382 = vmul.f32 %v379, %v379
    %384 = vrot.lane.b32.xlu0 %v382, 127
    %v385 = vpop.permute.xlu0 %384
    %v387 = vadd.f32 %v381, %v385
    %v388 = vsel %vm81, %v371, %v377
    %389 = vst.msk [vmem:[%s2 + $0xa] sm:$0x1] %vm42, %v388
    %v390 = vsub.f32 %v371, 0.6875
    %v391 = vmul.f32 %v46, %v390
    %393 = vrot.lane.b32.xlu0 %v379, 127
    %v394 = vpop.permute.xlu0 %393
    %v396 = vadd.f32 %v391, %v394
    %v397 = vmul.f32 %v396, 10.0
    %v398 = vtanh.pop %v397
    %v399 = vmul.f32 %v57, %v398
    %v400 = vmul.f32 %v377, 0.0625
    %402 = vrot.lane.b32.xlu0 %v400, 127
    %v403 = vpop.permute.xlu0 %402
    %v405 = vadd.f32 %v371, %v403
    %v406 = vmul.f32 %v399, 0.0625
    %408 = vrot.lane.b32.xlu0 %v406, 1
    %v409 = vpop.permute.xlu0 %408
    %v411 = vadd.f32 %v377, %v409
    %v412 = vsub.f32 %v405, 0.6875
    %v413 = vsub.f32 %v411, 1.0
    %v414 = vmul.f32 %v412, %v412
    %v415 = vadd.f32 %v387, %v414
    %v416 = vmul.f32 %v413, %v413
    %418 = vrot.lane.b32.xlu0 %v416, 127
    %v419 = vpop.permute.xlu0 %418
    %v421 = vadd.f32 %v415, %v419
    %v422 = vsel %vm81, %v405, %v411
    %423 = vst.msk [vmem:[%s2 + $0xb] sm:$0x1] %vm42, %v422
    %v424 = vsub.f32 %v405, 0.75
    %v425 = vmul.f32 %v46, %v424
    %427 = vrot.lane.b32.xlu0 %v413, 127
    %v428 = vpop.permute.xlu0 %427
    %v430 = vadd.f32 %v425, %v428
    %v431 = vmul.f32 %v430, 10.0
    %v432 = vtanh.pop %v431
    %v433 = vmul.f32 %v57, %v432
    %v434 = vmul.f32 %v411, 0.0625
    %436 = vrot.lane.b32.xlu0 %v434, 127
    %v437 = vpop.permute.xlu0 %436
    %v439 = vadd.f32 %v405, %v437
    %v440 = vmul.f32 %v433, 0.0625
    %442 = vrot.lane.b32.xlu0 %v440, 1
    %v443 = vpop.permute.xlu0 %442
    %v445 = vadd.f32 %v411, %v443
    %v446 = vsub.f32 %v439, 0.75
    %v447 = vsub.f32 %v445, 1.0
    %v448 = vmul.f32 %v446, %v446
    %v449 = vadd.f32 %v421, %v448
    %v450 = vmul.f32 %v447, %v447
    %452 = vrot.lane.b32.xlu0 %v450, 127
    %v453 = vpop.permute.xlu0 %452
    %v455 = vadd.f32 %v449, %v453
    %v456 = vsel %vm81, %v439, %v445
    %457 = vst.msk [vmem:[%s2 + $0xc] sm:$0x1] %vm42, %v456
    %v458 = vsub.f32 %v439, 0.8125
    %v459 = vmul.f32 %v46, %v458
    %461 = vrot.lane.b32.xlu0 %v447, 127
    %v462 = vpop.permute.xlu0 %461
    %v464 = vadd.f32 %v459, %v462
    %v465 = vmul.f32 %v464, 10.0
    %v466 = vtanh.pop %v465
    %v467 = vmul.f32 %v57, %v466
    %v468 = vmul.f32 %v445, 0.0625
    %470 = vrot.lane.b32.xlu0 %v468, 127
    %v471 = vpop.permute.xlu0 %470
    %v473 = vadd.f32 %v439, %v471
    %v474 = vmul.f32 %v467, 0.0625
    %476 = vrot.lane.b32.xlu0 %v474, 1
    %v477 = vpop.permute.xlu0 %476
    %v479 = vadd.f32 %v445, %v477
    %v480 = vsub.f32 %v473, 0.8125
    %v481 = vsub.f32 %v479, 1.0
    %v482 = vmul.f32 %v480, %v480
    %v483 = vadd.f32 %v455, %v482
    %v484 = vmul.f32 %v481, %v481
    %486 = vrot.lane.b32.xlu0 %v484, 127
    %v487 = vpop.permute.xlu0 %486
    %v489 = vadd.f32 %v483, %v487
    %v490 = vsel %vm81, %v473, %v479
    %491 = vst.msk [vmem:[%s2 + $0xd] sm:$0x1] %vm42, %v490
    %v492 = vsub.f32 %v473, 0.875
    %v493 = vmul.f32 %v46, %v492
    %495 = vrot.lane.b32.xlu0 %v481, 127
    %v496 = vpop.permute.xlu0 %495
    %v498 = vadd.f32 %v493, %v496
    %v499 = vmul.f32 %v498, 10.0
    %v500 = vtanh.pop %v499
    %v501 = vmul.f32 %v57, %v500
    %v502 = vmul.f32 %v479, 0.0625
    %504 = vrot.lane.b32.xlu0 %v502, 127
    %v505 = vpop.permute.xlu0 %504
    %v507 = vadd.f32 %v473, %v505
    %v508 = vmul.f32 %v501, 0.0625
    %510 = vrot.lane.b32.xlu0 %v508, 1
    %v511 = vpop.permute.xlu0 %510
    %v513 = vadd.f32 %v479, %v511
    %v514 = vsub.f32 %v507, 0.875
    %v515 = vsub.f32 %v513, 1.0
    %v516 = vmul.f32 %v514, %v514
    %v517 = vadd.f32 %v489, %v516
    %v518 = vmul.f32 %v515, %v515
    %520 = vrot.lane.b32.xlu0 %v518, 127
    %v521 = vpop.permute.xlu0 %520
    %v523 = vadd.f32 %v517, %v521
    %v524 = vsel %vm81, %v507, %v513
    %525 = vst.msk [vmem:[%s2 + $0xe] sm:$0x1] %vm42, %v524
    %v526 = vsub.f32 %v507, 0.9375
    %v527 = vmul.f32 %v46, %v526
    %529 = vrot.lane.b32.xlu0 %v515, 127
    %v530 = vpop.permute.xlu0 %529
    %v532 = vadd.f32 %v527, %v530
    %v533 = vmul.f32 %v532, 10.0
    %v534 = vtanh.pop %v533
    %v535 = vmul.f32 %v57, %v534
    %v536 = vmul.f32 %v513, 0.0625
    %538 = vrot.lane.b32.xlu0 %v536, 127
    %v539 = vpop.permute.xlu0 %538
    %v541 = vadd.f32 %v507, %v539
    %v542 = vmul.f32 %v535, 0.0625
    %544 = vrot.lane.b32.xlu0 %v542, 1
    %v545 = vpop.permute.xlu0 %544
    %v547 = vadd.f32 %v513, %v545
    %v548 = vsub.f32 %v541, 0.9375
    %v549 = vsub.f32 %v547, 1.0
    %v550 = vmul.f32 %v548, %v548
    %v551 = vadd.f32 %v523, %v550
    %v552 = vmul.f32 %v549, %v549
    %554 = vrot.lane.b32.xlu0 %v552, 127
    %v555 = vpop.permute.xlu0 %554
    %v557 = vadd.f32 %v551, %v555
    %v558 = vsel %vm81, %v541, %v547
    %559 = vst.msk [vmem:[%s2 + $0xf] sm:$0x1] %vm42, %v558
    %v560 = vsub.f32 %v541, 1.0
    %v561 = vmul.f32 %v46, %v560
    %563 = vrot.lane.b32.xlu0 %v549, 127
    %v564 = vpop.permute.xlu0 %563
    %v566 = vadd.f32 %v561, %v564
    %v567 = vmul.f32 %v566, 10.0
    %v568 = vtanh.pop %v567
    %v569 = vmul.f32 %v57, %v568
    %v570 = vmul.f32 %v547, 0.0625
    %572 = vrot.lane.b32.xlu0 %v570, 127
    %v573 = vpop.permute.xlu0 %572
    %v575 = vadd.f32 %v541, %v573
    %v576 = vmul.f32 %v569, 0.0625
    %578 = vrot.lane.b32.xlu0 %v576, 1
    %v579 = vpop.permute.xlu0 %578
    %v581 = vadd.f32 %v547, %v579
    %v582 = vsub.f32 %v575, 1.0
    %v583 = vsub.f32 %v581, 1.0
    %v584 = vmul.f32 %v582, %v582
    %v585 = vadd.f32 %v557, %v584
    %v586 = vmul.f32 %v583, %v583
    %588 = vrot.lane.b32.xlu0 %v586, 127
    %v589 = vpop.permute.xlu0 %588
    %v591 = vadd.f32 %v585, %v589
    %v592 = vsel %vm81, %v575, %v581
    %593 = vst.msk [vmem:[%s2 + $0x10] sm:$0x1] %vm42, %v592
    %vm594 = vcmask 0
    %595 = vst.msk [vmem:[#allocation7] sm:$0x1] %vm594, %v591
    // Predicated region
    $region18: #{tpu_custom_call.1} parent=1 // pred_check
      _
    $region19: #{tpu_custom_call.1} parent=1 // pred_check_branch
      %597 = sbr.rel (0) target = $region21
    $region20: #{tpu_custom_call.1} parent=1 // pred_region
      _
    $region21: #{tpu_custom_call.1} parent=1 // pred_fallthru
      _
    // Predicated region
    $region22: #{tpu_custom_call.1} parent=1 // pred_check
      _
    $region23: #{tpu_custom_call.1} parent=1 // pred_check_branch
      %599 = sbr.rel (0) target = $region25
    $region24: #{tpu_custom_call.1} parent=1 // pred_region
      %s601 = ssub.s32 16, 16
      %602 = vsyncadd [#allocation4], %s601
      %s604 = sshll.u32 [#allocation7], 4
      %s605 = int_to_ptr.vmem [resolvable:$true] %s604
      %607 = dma.vmem_to_hbm [thread:$0]  %s605, 16, %s3, [#allocation4]
    $region25: #{tpu_custom_call.1} parent=1 // pred_fallthru
      _
    // Predicated region
    $region26: #{tpu_custom_call.1} parent=1 // pred_check
      _
    $region27: #{tpu_custom_call.1} parent=1 // pred_check_branch
      %609 = sbr.rel (0) target = $region29
    $region28: #{tpu_custom_call.1} parent=1 // pred_region
      _
    $region29: #{tpu_custom_call.1} parent=1 // pred_fallthru
      _
    // Predicated region
    $region30: #{tpu_custom_call.1} parent=1 // pred_check
      _
    $region31: #{tpu_custom_call.1} parent=1 // pred_check_branch
      %611 = sbr.rel (0) target = $region33
    $region32: #{tpu_custom_call.1} parent=1 // pred_region
      %612 = dma.done [#allocation4], 16
    $region33: #{tpu_custom_call.1} parent=1 // pred_fallthru
      _
    %613 = vsyncpa [#allocation3], 1
    %614 = vsyncpa [#allocation4], 1
    %615 = vsyncpa [#allocation5], 1

</llo_original>
